<compile_context>
chip_gen: v5e
topology: v5e:2x2
jax: 0.10.0
libtpu: 0.0.40
codegen_flags: <defaults>
</compile_context>

<pallas_src>
import functools

import jax
import jax.numpy as jnp
from jax.experimental import pallas as pl
from jax.experimental.pallas import tpu as pltpu


def _round_up(n, m):
    return ((n + m - 1) // m) * m


def _mlp_kernel(x_ref, w1_ref, b1_ref, w2_ref, b2_ref, o_ref):
    # Layer 1: Linear(input_size, input_size) + ReLU, f32 accumulation on MXU.
    x = x_ref[...]
    h = jnp.dot(x.astype(w1_ref.dtype), w1_ref[...],
                preferred_element_type=jnp.float32)
    h = h + b1_ref[...].astype(jnp.float32)   # (1, K) broadcasts over batch tile
    h = jnp.maximum(h, 0.0)                   # ReLU (VPU, f32)
    # Dropout(0.2): identity in eval mode (see TODO at top of file).
    # Layer 2: Linear(input_size, output_size).
    out = jnp.dot(h.astype(w2_ref.dtype), w2_ref[...],
                  preferred_element_type=jnp.float32)
    out = out + b2_ref[...].astype(jnp.float32)   # (1, N)
    o_ref[...] = out.astype(o_ref.dtype)


def prepare_simple_mlp_params(w1, b1, w2, b2, *, param_dtype=None):
    """Pad (and optionally cast) parameters ONCE, outside the forward path.

    w1: (input_size, input_size)   b1: (input_size,)
    w2: (input_size, output_size)  b2: (output_size,)
    Returns lane-aligned padded copies (K = round_up(input_size, 128),
    N = round_up(output_size, 128)).
    """
    in_sz = w1.shape[0]
    out_sz = w2.shape[1]
    K = _round_up(in_sz, 128)
    N = _round_up(out_sz, 128)
    dt = jnp.dtype(param_dtype) if param_dtype is not None else w1.dtype

    w1p = jnp.zeros((K, K), dt).at[:in_sz, :in_sz].set(w1.astype(dt))
    b1p = jnp.zeros((1, K), dt).at[0, :in_sz].set(b1.astype(dt))
    w2p = jnp.zeros((K, N), dt).at[:in_sz, :out_sz].set(w2.astype(dt))
    b2p = jnp.zeros((1, N), dt).at[0, :out_sz].set(b2.astype(dt))
    return (w1p, b1p, w2p, b2p)


@functools.partial(jax.jit, static_argnames=("out_sz", "block_b"))
def simple_mlp_forward(x, params, *, out_sz, block_b=512):
    """Fused MLP forward on pre-padded params.  x: (B, input_size)."""
    w1p, b1p, w2p, b2p = params
    B, in_sz = x.shape
    K = w1p.shape[0]
    N = w2p.shape[1]
    x_item = jnp.dtype(x.dtype).itemsize
    p_item = jnp.dtype(w1p.dtype).itemsize

    # --- Batch tiling: big tiles amortize per-step overhead; prefer >=2 grid
    # steps so the "parallel" axis can shard across v7x's two TensorCores.
    b8 = _round_up(B, 8)
    TB = min(block_b, b8)
    if b8 >= 16:
        TB = min(TB, _round_up(pl.cdiv(b8, 2), 8))
    Bp = _round_up(B, TB)
    grid = (Bp // TB,)

    # --- Pad x only when actually needed (skip the extra HBM round trip).
    if (Bp, K) != (B, in_sz):
        xp = jnp.zeros((Bp, K), x.dtype).at[:B, :in_sz].set(x)
    else:
        xp = x

    # --- Explicit VMEM budget: double-buffered x/out tiles + resident params.
    param_bytes = (w1p.size + b1p.size + w2p.size + b2p.size) * p_item
    tile_bytes = 2 * TB * (K + N) * x_item
    needed = param_bytes + tile_bytes
    vmem_limit = int(min(max(2 * needed, 32 * 1024 * 1024), 64 * 1024 * 1024))

    out_padded = pl.pallas_call(
        _mlp_kernel,
        out_shape=jax.ShapeDtypeStruct((Bp, N), x.dtype),
        grid_spec=pl.GridSpec(
            grid=grid,
            in_specs=[
                # x: tiled over batch, pipelined (double-buffered) by Pallas.
                pl.BlockSpec((TB, K), lambda i: (i, 0)),
                # Grid-invariant params: whole-array VMEM residents, copied in
                # once for the entire call (no per-step double buffering).
                pl.BlockSpec(memory_space=pltpu.MemorySpace.VMEM),  # w1
                pl.BlockSpec(memory_space=pltpu.MemorySpace.VMEM),  # b1
                pl.BlockSpec(memory_space=pltpu.MemorySpace.VMEM),  # w2
                pl.BlockSpec(memory_space=pltpu.MemorySpace.VMEM),  # b2
            ],
            out_specs=pl.BlockSpec((TB, N), lambda i: (i, 0)),
        ),
        compiler_params=pltpu.CompilerParams(
            # Batch tiles are independent -> shard across TCs on v7x.
            dimension_semantics=("parallel",),
            vmem_limit_bytes=vmem_limit,
        ),
        cost_estimate=pl.CostEstimate(
            flops=2 * Bp * K * K + 2 * Bp * K * N,
            transcendentals=0,
            bytes_accessed=Bp * K * x_item + param_bytes + Bp * N * x_item,
        ),
    )(xp, w1p, b1p, w2p, b2p)

    # --- Slice back only when padding actually happened.
    if (Bp, N) != (B, out_sz):
        return out_padded[:B, :out_sz]
    return out_padded


def simple_mlp(x, w1, b1, w2, b2, *, block_b=512):
    """Convenience one-shot API (pads params per call).

    For repeated calls, hoist: params = prepare_simple_mlp_params(...);
    then call simple_mlp_forward(x, params, out_sz=...).
    """
    params = prepare_simple_mlp_params(w1, b1, w2, b2)
    return simple_mlp_forward(x, params, out_sz=w2.shape[1], block_b=block_b)


def simple_mlp_ref(x, w1, b1, w2, b2):
    h = jnp.maximum(x @ w1 + b1, 0.0)
    return h @ w2 + b2


if __name__ == "__main__":
    # Small shapes consistent with the module: input_size=32, output_size=8, batch=8.
    batch, input_size, output_size = 8, 32, 8

    key = jax.random.PRNGKey(0)
    k_x, k_w1, k_b1, k_w2, k_b2 = jax.random.split(key, 5)

    x = jax.random.normal(k_x, (batch, input_size), dtype=jnp.float32)

    # Deterministic parameter init (uniform, PyTorch-Linear-like scale).
    lim1 = 1.0 / jnp.sqrt(input_size)
    w1 = jax.random.uniform(k_w1, (input_size, input_size),
                            minval=-lim1, maxval=lim1, dtype=jnp.float32)
    b1 = jax.random.uniform(k_b1, (input_size,),
                            minval=-lim1, maxval=lim1, dtype=jnp.float32)
    lim2 = 1.0 / jnp.sqrt(input_size)
    w2 = jax.random.uniform(k_w2, (input_size, output_size),
                            minval=-lim2, maxval=lim2, dtype=jnp.float32)
    b2 = jax.random.uniform(k_b2, (output_size,),
                            minval=-lim2, maxval=lim2, dtype=jnp.float32)

    # Pad parameters once at "init" time (hoisted out of the forward path).
    params = prepare_simple_mlp_params(w1, b1, w2, b2)
    params = jax.block_until_ready(params)

    out = simple_mlp_forward(x, params, out_sz=output_size)
    out = jax.block_until_ready(out)

    ref = simple_mlp_ref(x, w1, b1, w2, b2)
    assert out.shape == (batch, output_size)
    assert jnp.allclose(out, ref, atol=1e-5, rtol=1e-5)

    print("KERNEL_OK")
</pallas_src>

<mosaic_0001>
module attributes {stable_mosaic.version = 11 : i64} {
  func.func @_mlp_kernel(%arg0: i32, %arg1: memref<8x128xf32, #tpu.memory_space<vmem>>, %arg2: memref<128x128xf32, #tpu.memory_space<vmem>>, %arg3: memref<1x128xf32, #tpu.memory_space<vmem>>, %arg4: memref<128x128xf32, #tpu.memory_space<vmem>>, %arg5: memref<1x128xf32, #tpu.memory_space<vmem>>, %arg6: memref<8x128xf32, #tpu.memory_space<vmem>>) attributes {dimension_semantics = [#tpu.dimension_semantics<parallel>], iteration_bounds = array<i64: 1>, scalar_prefetch = 0 : i64, scratch_operands = 0 : i64, tpu.core_type = #tpu.core_type<tc>, window_params = [{transform_indices = @transform_0, window_bounds = array<i64: 8, 128>}, {pipeline_mode = #tpu.pipeline_mode<synchronous>, transform_indices = @transform_1, window_bounds = array<i64: 128, 128>}, {pipeline_mode = #tpu.pipeline_mode<synchronous>, transform_indices = @transform_2, window_bounds = array<i64: 1, 128>}, {pipeline_mode = #tpu.pipeline_mode<synchronous>, transform_indices = @transform_3, window_bounds = array<i64: 128, 128>}, {pipeline_mode = #tpu.pipeline_mode<synchronous>, transform_indices = @transform_4, window_bounds = array<i64: 1, 128>}, {transform_indices = @transform_5, window_bounds = array<i64: 8, 128>}]} {
    %c0 = arith.constant 0 : index
    %c0_0 = arith.constant 0 : index
    %0 = vector.load %arg1[%c0, %c0_0] : memref<8x128xf32, #tpu.memory_space<vmem>>, vector<8x128xf32>
    %c0_1 = arith.constant 0 : index
    %c0_2 = arith.constant 0 : index
    %1 = vector.load %arg2[%c0_1, %c0_2] : memref<128x128xf32, #tpu.memory_space<vmem>>, vector<128x128xf32>
    %cst = arith.constant dense<0.000000e+00> : vector<8x128xf32>
    %2 = tpu.matmul %0, %1, %cst {dimension_numbers = #tpu.dot_dimension_numbers<[1], [0], [0], [1], [0, 0, 1, 1], [], []>} : vector<8x128xf32>, vector<128x128xf32>, vector<8x128xf32> -> vector<8x128xf32>
    %c0_3 = arith.constant 0 : index
    %c0_4 = arith.constant 0 : index
    %3 = vector.load %arg3[%c0_3, %c0_4] : memref<1x128xf32, #tpu.memory_space<vmem>>, vector<1x128xf32>
    %4 = vector.broadcast %3 : vector<1x128xf32> to vector<8x128xf32>
    %5 = arith.addf %2, %4 : vector<8x128xf32>
    %cst_5 = arith.constant 0.000000e+00 : f32
    %6 = vector.broadcast %cst_5 : f32 to vector<8x128xf32>
    %7 = arith.maximumf %5, %6 : vector<8x128xf32>
    %c0_6 = arith.constant 0 : index
    %c0_7 = arith.constant 0 : index
    %8 = vector.load %arg4[%c0_6, %c0_7] : memref<128x128xf32, #tpu.memory_space<vmem>>, vector<128x128xf32>
    %cst_8 = arith.constant dense<0.000000e+00> : vector<8x128xf32>
    %9 = tpu.matmul %7, %8, %cst_8 {dimension_numbers = #tpu.dot_dimension_numbers<[1], [0], [0], [1], [0, 0, 1, 1], [], []>} : vector<8x128xf32>, vector<128x128xf32>, vector<8x128xf32> -> vector<8x128xf32>
    %c0_9 = arith.constant 0 : index
    %c0_10 = arith.constant 0 : index
    %10 = vector.load %arg5[%c0_9, %c0_10] : memref<1x128xf32, #tpu.memory_space<vmem>>, vector<1x128xf32>
    %11 = vector.broadcast %10 : vector<1x128xf32> to vector<8x128xf32>
    %12 = arith.addf %9, %11 : vector<8x128xf32>
    %c0_11 = arith.constant 0 : index
    %c0_12 = arith.constant 0 : index
    %13 = vector.load %arg6[%c0_11, %c0_12] : memref<8x128xf32, #tpu.memory_space<vmem>>, vector<8x128xf32>
    tpu.vector_store %arg6[%c0_11, %c0_12], %12 {strides = array<i32>} : memref<8x128xf32, #tpu.memory_space<vmem>>, vector<8x128xf32>,
    return
  }
  func.func @transform_0(%arg0: i32) -> (i32, i32) {
    %c0_i32 = arith.constant 0 : i32
    %c0_i32_0 = arith.constant 0 : i32
    return %arg0, %c0_i32 : i32, i32
  }
  func.func @transform_1(%arg0: i32) -> (i32, i32) {
    %c0_i32 = arith.constant 0 : i32
    %c0_i32_0 = arith.constant 0 : i32
    %c0_i32_1 = arith.constant 0 : i32
    return %c0_i32, %c0_i32_0 : i32, i32
  }
  func.func @transform_2(%arg0: i32) -> (i32, i32) {
    %c0_i32 = arith.constant 0 : i32
    %c0_i32_0 = arith.constant 0 : i32
    %c0_i32_1 = arith.constant 0 : i32
    return %c0_i32, %c0_i32_0 : i32, i32
  }
  func.func @transform_3(%arg0: i32) -> (i32, i32) {
    %c0_i32 = arith.constant 0 : i32
    %c0_i32_0 = arith.constant 0 : i32
    %c0_i32_1 = arith.constant 0 : i32
    return %c0_i32, %c0_i32_0 : i32, i32
  }
  func.func @transform_4(%arg0: i32) -> (i32, i32) {
    %c0_i32 = arith.constant 0 : i32
    %c0_i32_0 = arith.constant 0 : i32
    %c0_i32_1 = arith.constant 0 : i32
    return %c0_i32, %c0_i32_0 : i32, i32
  }
  func.func @transform_5(%arg0: i32) -> (i32, i32) {
    %c0_i32 = arith.constant 0 : i32
    %c0_i32_0 = arith.constant 0 : i32
    return %arg0, %c0_i32 : i32, i32
  }
}

</mosaic_0001>

<llo_original>
// kernel: simple_mlp_forward.1
$region0: #{simple_mlp_forward.1}
  #allocation0 [shape = 'u32[]', space=smem, size = 0x4, offset = 0x4, fixed_abs, tag = 'smem constant byte address 0x4 - core index']
  #allocation1 [shape = 'u32[72,128]{1,0:T(1,128)}', space=vmem, size = 0x9000, scoped, tag = 'internal scratch']
  %s0 = inlined_call_operand.vmem [shape: f32[8,128], index: 0, kind: input, shape index: {}]
  %s1 = inlined_call_operand.hbm [shape: f32[128,128], index: 1, kind: input, shape index: {}]
  %s2 = inlined_call_operand.vmem [shape: f32[1,128], index: 2, kind: input, shape index: {}]
  %s3 = inlined_call_operand.hbm [shape: f32[128,128], index: 3, kind: input, shape index: {}]
  %s4 = inlined_call_operand.vmem [shape: f32[1,128], index: 4, kind: input, shape index: {}]
  %s5 = inlined_call_operand.hbm [shape: f32[8,128], index: 5, kind: output, shape index: {}]
  %s6 = sld [smem:[#allocation0]]
  $region38: #{simple_mlp_forward.1} parent=0
    _
  %s8 = ssub.s32 1, %s6
  %s9 = scalar_select 0, %s8, %s6
  $region1: #{simple_mlp_forward.1} parent=0
    #allocation2 [shape = 'u8[65536]{0}', space=vmem, size = 0x10000, scoped, tag = 'input window, operand 1, single buffered']
    #allocation3 [shape = 's32[1]{0}', space=sflag, size = 0x4, scoped, tag = 'scoped memory for simple_mlp_forward.1']
    #allocation4 [shape = 's32[1]{0}', space=sflag, size = 0x4, scoped, tag = 'scoped memory for simple_mlp_forward.1']
    #allocation5 [shape = 'u8[65536]{0}', space=vmem, size = 0x10000, scoped, tag = 'input window, operand 3, single buffered']
    #allocation6 [shape = 's32[1]{0}', space=sflag, size = 0x4, scoped, tag = 'scoped memory for simple_mlp_forward.1']
    #allocation7 [shape = 'u8[4096]{0}', space=vmem, size = 0x1000, scoped, tag = 'output window, operand 0, single buffered']
    %10 = vsyncpa [#allocation3], 0
    %11 = vsyncpa [#allocation6], 0
    %12 = vsyncpa [#allocation4], 0
    // Predicated region
    $region2: #{simple_mlp_forward.1} parent=1 // pred_check
      _
    $region3: #{simple_mlp_forward.1} parent=1 // pred_check_branch
      %14 = sbr.rel (0) target = $region5
    $region4: #{simple_mlp_forward.1} parent=1 // pred_region
      _
    $region5: #{simple_mlp_forward.1} parent=1 // pred_fallthru
      _
    // Predicated region
    $region6: #{simple_mlp_forward.1} parent=1 // pred_check
      _
    $region7: #{simple_mlp_forward.1} parent=1 // pred_check_branch
      %16 = sbr.rel (0) target = $region9
    $region8: #{simple_mlp_forward.1} parent=1 // pred_region
      %18 = vsyncadd [#allocation3], 0
      %s19 = sshll.u32 %s1, 4
      %s20 = int_to_ptr.hbm [resolvable:$true] %s19
      %s21 = sshll.u32 [#allocation2], 4
      %s22 = int_to_ptr.vmem [resolvable:$true] %s21
      %27 = dma.hbm_to_vmem [thread:$0]  %s20, 2048, %s22, [#allocation3], 128, 128, 8
    $region9: #{simple_mlp_forward.1} parent=1 // pred_fallthru
      _
    // Predicated region
    $region10: #{simple_mlp_forward.1} parent=1 // pred_check
      _
    $region11: #{simple_mlp_forward.1} parent=1 // pred_check_branch
      %29 = sbr.rel (0) target = $region13
    $region12: #{simple_mlp_forward.1} parent=1 // pred_region
      _
    $region13: #{simple_mlp_forward.1} parent=1 // pred_fallthru
      _
    // Predicated region
    $region14: #{simple_mlp_forward.1} parent=1 // pred_check
      _
    $region15: #{simple_mlp_forward.1} parent=1 // pred_check_branch
      %31 = sbr.rel (0) target = $region17
    $region16: #{simple_mlp_forward.1} parent=1 // pred_region
      %33 = vsyncadd [#allocation6], 0
      %s34 = sshll.u32 %s3, 4
      %s35 = int_to_ptr.hbm [resolvable:$true] %s34
      %s36 = sshll.u32 [#allocation5], 4
      %s37 = int_to_ptr.vmem [resolvable:$true] %s36
      %42 = dma.hbm_to_vmem [thread:$0]  %s35, 2048, %s37, [#allocation6], 128, 128, 8
    $region17: #{simple_mlp_forward.1} parent=1 // pred_fallthru
      _
    // Predicated region
    $region18: #{simple_mlp_forward.1} parent=1 // pred_check
      _
    $region19: #{simple_mlp_forward.1} parent=1 // pred_check_branch
      %44 = sbr.rel (0) target = $region21
    $region20: #{simple_mlp_forward.1} parent=1 // pred_region
      _
    $region21: #{simple_mlp_forward.1} parent=1 // pred_fallthru
      _
    // Predicated region
    $region22: #{simple_mlp_forward.1} parent=1 // pred_check
      _
    $region23: #{simple_mlp_forward.1} parent=1 // pred_check_branch
      %46 = sbr.rel (0) target = $region25
    $region24: #{simple_mlp_forward.1} parent=1 // pred_region
      %48 = dma.done [#allocation3], 2048
    $region25: #{simple_mlp_forward.1} parent=1 // pred_fallthru
      _
    // Predicated region
    $region26: #{simple_mlp_forward.1} parent=1 // pred_check
      _
    $region27: #{simple_mlp_forward.1} parent=1 // pred_check_branch
      %50 = sbr.rel (0) target = $region29
    $region28: #{simple_mlp_forward.1} parent=1 // pred_region
      %52 = dma.done [#allocation6], 2048
    $region29: #{simple_mlp_forward.1} parent=1 // pred_fallthru
      _
    %v53 = vld [vmem:[%s0] sm:$0xff]
    %v54 = vld [vmem:[#allocation2] sm:$0xff]
    %v55 = vld [vmem:[#allocation2 + $0x8] sm:$0xff]
    %v56 = vld [vmem:[#allocation2 + $0x10] sm:$0xff]
    %v57 = vld [vmem:[#allocation2 + $0x18] sm:$0xff]
    %v58 = vld [vmem:[#allocation2 + $0x20] sm:$0xff]
    %v59 = vld [vmem:[#allocation2 + $0x28] sm:$0xff]
    %v60 = vld [vmem:[#allocation2 + $0x30] sm:$0xff]
    %v61 = vld [vmem:[#allocation2 + $0x38] sm:$0xff]
    %v62 = vld [vmem:[#allocation2 + $0x40] sm:$0xff]
    %v63 = vld [vmem:[#allocation2 + $0x48] sm:$0xff]
    %v64 = vld [vmem:[#allocation2 + $0x50] sm:$0xff]
    %v65 = vld [vmem:[#allocation2 + $0x58] sm:$0xff]
    %v66 = vld [vmem:[#allocation2 + $0x60] sm:$0xff]
    %v67 = vld [vmem:[#allocation2 + $0x68] sm:$0xff]
    %v68 = vld [vmem:[#allocation2 + $0x70] sm:$0xff]
    %v69 = vld [vmem:[#allocation2 + $0x78] sm:$0xff]
    %v70 = vld [vmem:[%s2] sm:$0x1]
    %v72 = vperm.slane %v70, 0
    %74 = vmatpush.msra.mxu0 %v69
    %75 = vmatpush.msra.mxu0 %v68
    %76 = vmatpush.msra.mxu0 %v67
    %77 = vmatpush.msra.mxu0 %v66
    %78 = vmatpush.msra.mxu0 %v65
    %79 = vmatpush.msra.mxu0 %v64
    %80 = vmatpush.msra.mxu0 %v63
    %81 = vmatpush.msra.mxu0 %v62
    %82 = vmatpush.msra.mxu0 %v61
    %83 = vmatpush.msra.mxu0 %v60
    %84 = vmatpush.msra.mxu0 %v59
    %85 = vmatpush.msra.mxu0 %v58
    %86 = vmatpush.msra.mxu0 %v57
    %87 = vmatpush.msra.mxu0 %v56
    %88 = vmatpush.msra.mxu0 %v55
    %89 = vmatpush.msra.mxu0 %v54
    %90 = vmatmul.f32.gmra.mxu0 %v53
    %v91 = vpop.f32.mrf.mxu0
    %v92 = vadd.f32 %v72, %v91
    %93 = vdwg.mxu0
    %v94 = vmax.f32 %v92, 0.0
    %v95 = vld [vmem:[#allocation5] sm:$0xff]
    %v96 = vld [vmem:[#allocation5 + $0x8] sm:$0xff]
    %v97 = vld [vmem:[#allocation5 + $0x10] sm:$0xff]
    %v98 = vld [vmem:[#allocation5 + $0x18] sm:$0xff]
    %v99 = vld [vmem:[#allocation5 + $0x20] sm:$0xff]
    %v100 = vld [vmem:[#allocation5 + $0x28] sm:$0xff]
    %v101 = vld [vmem:[#allocation5 + $0x30] sm:$0xff]
    %v102 = vld [vmem:[#allocation5 + $0x38] sm:$0xff]
    %v103 = vld [vmem:[#allocation5 + $0x40] sm:$0xff]
    %v104 = vld [vmem:[#allocation5 + $0x48] sm:$0xff]
    %v105 = vld [vmem:[#allocation5 + $0x50] sm:$0xff]
    %v106 = vld [vmem:[#allocation5 + $0x58] sm:$0xff]
    %v107 = vld [vmem:[#allocation5 + $0x60] sm:$0xff]
    %v108 = vld [vmem:[#allocation5 + $0x68] sm:$0xff]
    %v109 = vld [vmem:[#allocation5 + $0x70] sm:$0xff]
    %v110 = vld [vmem:[#allocation5 + $0x78] sm:$0xff]
    %v111 = vld [vmem:[%s4] sm:$0x1]
    %v113 = vperm.slane %v111, 0
    %115 = vmatpush.msra.mxu0 %v110
    %116 = vmatpush.msra.mxu0 %v109
    %117 = vmatpush.msra.mxu0 %v108
    %118 = vmatpush.msra.mxu0 %v107
    %119 = vmatpush.msra.mxu0 %v106
    %120 = vmatpush.msra.mxu0 %v105
    %121 = vmatpush.msra.mxu0 %v104
    %122 = vmatpush.msra.mxu0 %v103
    %123 = vmatpush.msra.mxu0 %v102
    %124 = vmatpush.msra.mxu0 %v101
    %125 = vmatpush.msra.mxu0 %v100
    %126 = vmatpush.msra.mxu0 %v99
    %127 = vmatpush.msra.mxu0 %v98
    %128 = vmatpush.msra.mxu0 %v97
    %129 = vmatpush.msra.mxu0 %v96
    %130 = vmatpush.msra.mxu0 %v95
    %131 = vmatmul.f32.gmra.mxu0 %v94
    %v132 = vpop.f32.mrf.mxu0
    %v133 = vadd.f32 %v113, %v132
    %134 = vdwg.mxu0
    %135 = vst [vmem:[#allocation7] sm:$0xff] %v133
    // Predicated region
    $region30: #{simple_mlp_forward.1} parent=1 // pred_check
      _
    $region31: #{simple_mlp_forward.1} parent=1 // pred_check_branch
      %137 = sbr.rel (0) target = $region33
    $region32: #{simple_mlp_forward.1} parent=1 // pred_region
      %139 = vsyncadd [#allocation4], 0
      %s141 = sshll.u32 [#allocation7], 4
      %s142 = int_to_ptr.vmem [resolvable:$true] %s141
      %s143 = sshll.u32 %s5, 4
      %s144 = int_to_ptr.hbm [resolvable:$true] %s143
      %146 = dma.vmem_to_hbm [thread:$0]  %s142, 128, %s144, [#allocation4]
    $region33: #{simple_mlp_forward.1} parent=1 // pred_fallthru
      _
    // Predicated region
    $region34: #{simple_mlp_forward.1} parent=1 // pred_check
      _
    $region35: #{simple_mlp_forward.1} parent=1 // pred_check_branch
      %148 = sbr.rel (0) target = $region37
    $region36: #{simple_mlp_forward.1} parent=1 // pred_region
      %150 = dma.done [#allocation4], 128
    $region37: #{simple_mlp_forward.1} parent=1 // pred_fallthru
      _
    %151 = vsyncpa [#allocation3], 1
    %152 = vsyncpa [#allocation6], 1
    %153 = vsyncpa [#allocation4], 1

</llo_original>
